<compile_context>
chip_gen: v6e
topology: v6e:2x2x1
jax: 0.10.0
libtpu: 0.0.40
codegen_flags: <defaults>
</compile_context>

<pallas_src>
import functools

import jax
import jax.numpy as jnp
from jax.experimental import pallas as pl
from jax.experimental.pallas import tpu as pltpu


# ---------------------------------------------------------------------------
# Kernels
# ---------------------------------------------------------------------------

def _masked_sum_kernel(inv_ref, seq_ref, msk_ref, out_ref, acc_ref, *, n_valid, tn):
    """acc += sum_n(seq * msk); out = acc * (1/sum(msk)) at the last N step."""
    n = pl.program_id(2)

    @pl.when(n == 0)
    def _init():
        acc_ref[...] = jnp.zeros_like(acc_ref)

    seq = seq_ref[...].astype(jnp.float32)          # (TB, TN, TD)
    msk = msk_ref[...]                              # (TB, TN, 1), float32

    if n_valid is not None:
        # Ragged node tail: zero both operands in the padded region (pad data
        # is undefined and could be NaN/Inf).
        idx = jax.lax.broadcasted_iota(jnp.int32, msk.shape, 1)
        keep = idx < (n_valid - n * tn)
        msk = jnp.where(keep, msk, 0.0)
        seq = jnp.where(keep, seq, 0.0)

    acc_ref[...] += jnp.sum(seq * msk, axis=1)

    @pl.when(n == pl.num_programs(2) - 1)
    def _finalize():
        # inv_ref holds the GLOBAL 1/sum(msk) (hoisted to the wrapper, SMEM).
        out_ref[...] = (acc_ref[...] * inv_ref[0, 0]).astype(out_ref.dtype)


def _mean_kernel(seq_ref, out_ref, acc_ref, *, inv_n, n_valid, tn):
    """acc += sum_n(seq); out = acc * (1/N) at the last N step."""
    n = pl.program_id(2)

    @pl.when(n == 0)
    def _init():
        acc_ref[...] = jnp.zeros_like(acc_ref)

    seq = seq_ref[...].astype(jnp.float32)          # (TB, TN, TD)

    if n_valid is not None:
        idx = jax.lax.broadcasted_iota(
            jnp.int32, (seq.shape[0], seq.shape[1], 1), 1)
        seq = jnp.where(idx < (n_valid - n * tn), seq, 0.0)

    acc_ref[...] += jnp.sum(seq, axis=1)

    @pl.when(n == pl.num_programs(2) - 1)
    def _finalize():
        out_ref[...] = (acc_ref[...] * inv_n).astype(out_ref.dtype)


# ---------------------------------------------------------------------------
# Tiling helpers
# ---------------------------------------------------------------------------

def _cdiv(a, b):
    return -(-a // b)


def _round_up(x, m):
    return _cdiv(x, m) * m


def _vmem_capacity_bytes():
    """Generation-aware VMEM capacity (v5e/v6e 128 MiB, v7x 64 MiB)."""
    try:
        info = pltpu.get_tpu_info()
        cap = getattr(info, "vmem_capacity_bytes", None)
        if cap:
            return int(cap)
    except Exception:
        pass
    return 64 * 1024 * 1024  # conservative (v7x-sized) fallback


def _pick_tb(B):
    """Batch tile: multiple of 8 (or full B) so out/msk blocks stay sublane
    aligned, preferring >= 2 blocks along the 'parallel' batch axis."""
    if B <= 8:
        return B
    for t in (64, 32, 16, 8):
        if t < B and B % t == 0:
            return t
    return 8  # awkward B: 8-aligned tiling; ragged last block is clipped on writeback


def _pick_tiles(B, N, D, seq_itemsize, seq_budget_bytes, masked):
    """Pick (TB, TD, TN) obeying the (8, 128) layout rules and the VMEM budget.

    Budget accounting per node row includes the seq row AND the lane-padded
    (TB, TN, 1) mask row (size-1 minor dim pads to 128 lanes in VMEM).
    """
    tb = _pick_tb(B)

    # Split the feature axis only when the batch axis cannot feed two cores.
    if _cdiv(B, tb) >= 2 or D < 256:
        td = D
    else:
        td = _round_up(_cdiv(D, 2), 128)

    def row_bytes(tb_, td_):
        r = tb_ * td_ * seq_itemsize
        if masked:
            r += tb_ * 128 * 4          # lane-padded float32 mask row
        return r

    # Make sure at least a 128-row node tile fits the per-buffer budget.
    while row_bytes(tb, td) * 128 > seq_budget_bytes and td >= 256:
        td = _round_up(_cdiv(td, 2), 128)
    while row_bytes(tb, td) * 128 > seq_budget_bytes and tb > 8:
        tb = max(8, tb // 2)

    row = row_bytes(tb, td)
    if N * row <= seq_budget_bytes:
        tn = N                          # whole node axis: full-extent block
    else:
        tn = max(128, (seq_budget_bytes // row) // 128 * 128)  # 128-multiple
        tn = min(tn, _round_up(N, 128))
    return tb, td, tn


# ---------------------------------------------------------------------------
# Wrapper
# ---------------------------------------------------------------------------

def avg_readout(seq, msk=None, *, block_budget_bytes=None):
    """Pallas implementation of AvgReadout.forward.

    seq: (B, N, D); msk: None, (B, N) or (B, N, 1); returns (B, D).
    """
    B, N, D = seq.shape
    out_shape = jax.ShapeDtypeStruct((B, D), seq.dtype)

    cap = _vmem_capacity_bytes()
    if block_budget_bytes is None:
        # One double-buffered seq(+mask) set per step; cap/8 per buffer keeps
        # 2x buffers + accumulator well inside ~cap/3 on every generation.
        block_budget_bytes = max(cap // 8, 512 * 1024)
    vmem_limit = min(cap * 3 // 4, 128 * 1024 * 1024)

    masked = msk is not None
    itemsize = jnp.dtype(seq.dtype).itemsize
    TB, TD, TN = _pick_tiles(B, N, D, itemsize, block_budget_bytes, masked)

    grid = (_cdiv(B, TB), _cdiv(D, TD), _cdiv(N, TN))
    n_valid = N if (N % TN) != 0 else None   # compile-time ragged-tail flag

    seq_spec = pl.BlockSpec((TB, TN, TD), lambda b, d, n: (b, n, d))
    out_spec = pl.BlockSpec((TB, TD), lambda b, d, n: (b, d))
    scratch = [pltpu.VMEM((TB, TD), jnp.float32)]

    compiler_params = pltpu.CompilerParams(
        dimension_semantics=("parallel", "parallel", "arbitrary"),
        vmem_limit_bytes=vmem_limit)

    if not masked:
        kernel = functools.partial(
            _mean_kernel, inv_n=float(1.0 / N), n_valid=n_valid, tn=TN)
        return pl.pallas_call(
            kernel,
            out_shape=out_shape,
            grid=grid,
            in_specs=[seq_spec],
            out_specs=out_spec,
            scratch_shapes=scratch,
            compiler_params=compiler_params,
        )(seq)

    if msk.ndim == 2:                        # allow (B, N) masks
        msk = msk[:, :, None]
    msk = msk.astype(jnp.float32)

    # torch.sum(msk) is a GLOBAL scalar; compute it once in the wrapper and
    # pass 1/sum as a (1, 1) SMEM scalar (all-zero mask -> inf/NaN like torch).
    inv_total = jnp.reshape(1.0 / jnp.sum(msk), (1, 1)).astype(jnp.float32)

    msk_spec = pl.BlockSpec((TB, TN, 1), lambda b, d, n: (b, n, 0))
    smem_spec = pl.BlockSpec(memory_space=pltpu.MemorySpace.SMEM)

    kernel = functools.partial(_masked_sum_kernel, n_valid=n_valid, tn=TN)
    return pl.pallas_call(
        kernel,
        out_shape=out_shape,
        grid=grid,
        in_specs=[smem_spec, seq_spec, msk_spec],
        out_specs=out_spec,
        scratch_shapes=scratch,
        compiler_params=compiler_params,
    )(inv_total, seq, msk)


# ---------------------------------------------------------------------------
# Self-test
# ---------------------------------------------------------------------------

if __name__ == "__main__":
    key = jax.random.PRNGKey(0)
    k_seq, k_msk = jax.random.split(key)

    # 1) Small DGI-like shapes: (batch, nodes, hidden) = (2, 8, 32).
    B, N, D = 2, 8, 32
    seq = jax.random.normal(k_seq, (B, N, D), dtype=jnp.float32)
    msk = (jax.random.uniform(k_msk, (B, N, 1)) > 0.3).astype(jnp.float32)

    out_masked = avg_readout(seq, msk)
    jax.block_until_ready(out_masked)
    ref_masked = jnp.sum(seq * msk, axis=1) / jnp.sum(msk)
    assert out_masked.shape == (B, D)
    assert jnp.allclose(out_masked, ref_masked, atol=1e-5, rtol=1e-5)

    out_mean = avg_readout(seq, None)
    jax.block_until_ready(out_mean)
    assert jnp.allclose(out_mean, jnp.mean(seq, axis=1), atol=1e-5, rtol=1e-5)

    # 2) Multi-step streaming reduce with a ragged node tail (N not a multiple
    #    of the 128-row tile): exercises cdiv grid + in-kernel tail masking.
    B2, N2, D2 = 2, 200, 128
    seq2 = jax.random.normal(k_seq, (B2, N2, D2), dtype=jnp.float32)
    msk2 = (jax.random.uniform(k_msk, (B2, N2, 1)) > 0.5).astype(jnp.float32)

    out2 = avg_readout(seq2, msk2, block_budget_bytes=128 * 1024)
    jax.block_until_ready(out2)
    ref2 = jnp.sum(seq2 * msk2, axis=1) / jnp.sum(msk2)
    assert jnp.allclose(out2, ref2, atol=1e-5, rtol=1e-5)

    out2m = avg_readout(seq2, None, block_budget_bytes=128 * 1024)
    jax.block_until_ready(out2m)
    assert jnp.allclose(out2m, jnp.mean(seq2, axis=1), atol=1e-5, rtol=1e-5)

    # 3) B == 1 with a larger hidden dim: feature axis splits into two
    #    parallel 128-aligned blocks (keeps both v7x TensorCores busy).
    B3, N3, D3 = 1, 64, 512
    seq3 = jax.random.normal(k_seq, (B3, N3, D3), dtype=jnp.float32)
    msk3 = (jax.random.uniform(k_msk, (B3, N3)) > 0.4).astype(jnp.float32)  # 2-D mask

    out3 = avg_readout(seq3, msk3)
    jax.block_until_ready(out3)
    ref3 = jnp.sum(seq3 * msk3[:, :, None], axis=1) / jnp.sum(msk3)
    assert jnp.allclose(out3, ref3, atol=1e-5, rtol=1e-5)

    out3m = avg_readout(seq3, None)
    jax.block_until_ready(out3m)
    assert jnp.allclose(out3m, jnp.mean(seq3, axis=1), atol=1e-5, rtol=1e-5)

    print("KERNEL_OK")
</pallas_src>

<mosaic_0001>
module attributes {stable_mosaic.version = 11 : i64} {
  func.func @_masked_sum_kernel(%arg0: i32, %arg1: i32, %arg2: i32, %arg3: memref<1x1xf32, #tpu.memory_space<smem>>, %arg4: memref<2x8x32xf32, #tpu.memory_space<vmem>>, %arg5: memref<2x8x1xf32, #tpu.memory_space<vmem>>, %arg6: memref<2x32xf32, #tpu.memory_space<vmem>>, %arg7: memref<2x32xf32, #tpu.memory_space<vmem>>) attributes {dimension_semantics = [#tpu.dimension_semantics<parallel>, #tpu.dimension_semantics<parallel>, #tpu.dimension_semantics<arbitrary>], iteration_bounds = array<i64: 1, 1, 1>, scalar_prefetch = 0 : i64, scratch_operands = 1 : i64, tpu.core_type = #tpu.core_type<tc>, window_params = [{transform_indices = @transform_0, window_bounds = array<i64: 1, 1>}, {transform_indices = @transform_1, window_bounds = array<i64: 2, 8, 32>}, {transform_indices = @transform_2, window_bounds = array<i64: 2, 8, 1>}, {transform_indices = @transform_3, window_bounds = array<i64: 2, 32>}]} {
    %c0_i32 = arith.constant 0 : i32
    %0 = arith.cmpi eq, %arg2, %c0_i32 : i32
    %1 = arith.extui %0 : i1 to i32
    %c0_i32_0 = arith.constant 0 : i32
    %2 = arith.cmpi ne, %1, %c0_i32_0 : i32
    scf.if %2 {
      %cst_12 = arith.constant 0.000000e+00 : f32
      %14 = vector.broadcast %cst_12 : f32 to vector<2x32xf32>
      %c0_13 = arith.constant 0 : index
      %c0_14 = arith.constant 0 : index
      %15 = vector.load %arg7[%c0_13, %c0_14] : memref<2x32xf32, #tpu.memory_space<vmem>>, vector<2x32xf32>
      tpu.vector_store %arg7[%c0_13, %c0_14], %14 {strides = array<i32>} : memref<2x32xf32, #tpu.memory_space<vmem>>, vector<2x32xf32>,
    } else {
    }
    %c0 = arith.constant 0 : index
    %c0_1 = arith.constant 0 : index
    %c0_2 = arith.constant 0 : index
    %3 = vector.load %arg4[%c0, %c0_1, %c0_2] : memref<2x8x32xf32, #tpu.memory_space<vmem>>, vector<2x8x32xf32>
    %c0_3 = arith.constant 0 : index
    %c0_4 = arith.constant 0 : index
    %c0_5 = arith.constant 0 : index
    %4 = vector.load %arg5[%c0_3, %c0_4, %c0_5] : memref<2x8x1xf32, #tpu.memory_space<vmem>>, vector<2x8x1xf32>
    %c0_6 = arith.constant 0 : index
    %c0_7 = arith.constant 0 : index
    %5 = vector.load %arg7[%c0_6, %c0_7] : memref<2x32xf32, #tpu.memory_space<vmem>>, vector<2x32xf32>
    %6 = vector.broadcast %4 : vector<2x8x1xf32> to vector<2x8x32xf32>
    %7 = arith.mulf %3, %6 : vector<2x8x32xf32>
    %cst = arith.constant dense<0.000000e+00> : vector<2x32xf32>
    %8 = vector.multi_reduction <add>, %7, %cst [1] : vector<2x8x32xf32> to vector<2x32xf32>
    %9 = arith.addf %5, %8 : vector<2x32xf32>
    %c0_8 = arith.constant 0 : index
    %c0_9 = arith.constant 0 : index
    %10 = vector.load %arg7[%c0_8, %c0_9] : memref<2x32xf32, #tpu.memory_space<vmem>>, vector<2x32xf32>
    tpu.vector_store %arg7[%c0_8, %c0_9], %9 {strides = array<i32>} : memref<2x32xf32, #tpu.memory_space<vmem>>, vector<2x32xf32>,
    %c0_i32_10 = arith.constant 0 : i32
    %11 = arith.cmpi eq, %arg2, %c0_i32_10 : i32
    %12 = arith.extui %11 : i1 to i32
    %c0_i32_11 = arith.constant 0 : i32
    %13 = arith.cmpi ne, %12, %c0_i32_11 : i32
    scf.if %13 {
      %c0_12 = arith.constant 0 : index
      %c0_13 = arith.constant 0 : index
      %14 = vector.load %arg7[%c0_12, %c0_13] : memref<2x32xf32, #tpu.memory_space<vmem>>, vector<2x32xf32>
      %c0_14 = arith.constant 0 : index
      %c0_15 = arith.constant 0 : index
      %15 = memref.load %arg3[%c0_14, %c0_15] : memref<1x1xf32, #tpu.memory_space<smem>>
      %16 = vector.broadcast %15 : f32 to vector<2x32xf32>
      %17 = arith.mulf %14, %16 : vector<2x32xf32>
      %c0_16 = arith.constant 0 : index
      %c0_17 = arith.constant 0 : index
      %18 = vector.load %arg6[%c0_16, %c0_17] : memref<2x32xf32, #tpu.memory_space<vmem>>, vector<2x32xf32>
      tpu.vector_store %arg6[%c0_16, %c0_17], %17 {strides = array<i32>} : memref<2x32xf32, #tpu.memory_space<vmem>>, vector<2x32xf32>,
    } else {
    }
    return
  }
  func.func @transform_0(%arg0: i32, %arg1: i32, %arg2: i32) -> (i32, i32) {
    %c0_i32 = arith.constant 0 : i32
    %c0_i32_0 = arith.constant 0 : i32
    %c0_i32_1 = arith.constant 0 : i32
    return %c0_i32, %c0_i32_0 : i32, i32
  }
  func.func @transform_1(%arg0: i32, %arg1: i32, %arg2: i32) -> (i32, i32, i32) {
    %c0_i32 = arith.constant 0 : i32
    return %arg0, %arg2, %arg1 : i32, i32, i32
  }
  func.func @transform_2(%arg0: i32, %arg1: i32, %arg2: i32) -> (i32, i32, i32) {
    %c0_i32 = arith.constant 0 : i32
    %c0_i32_0 = arith.constant 0 : i32
    return %arg0, %arg2, %c0_i32 : i32, i32, i32
  }
  func.func @transform_3(%arg0: i32, %arg1: i32, %arg2: i32) -> (i32, i32) {
    %c0_i32 = arith.constant 0 : i32
    return %arg0, %arg1 : i32, i32
  }
}

</mosaic_0001>

<llo_original>
// kernel: tpu_custom_call.1
$region0: #{tpu_custom_call.1}
  #allocation0 [shape = 'u32[]', space=smem, size = 0x4, offset = 0x4, fixed_abs, tag = 'smem constant byte address 0x4 - core index']
  #allocation1 [shape = 'u32[144,128]{1,0:T(1,128)}', space=vmem, size = 0x12000, scoped, tag = 'internal scratch']
  #allocation2 [shape = 'f32[2,32]{1,0:T(2,128)}', space=vmem, size = 0x400, scoped, tag = 'scratch operand']
  #allocation3 [shape = 'f32[1,1]{1,0:T(1,128)S(6)}', space=smem, size = 0x200, scoped, tag = 'scoped memory for tpu_custom_call.1']
  %s0 = inlined_call_operand.<no memory space> [shape: f32[1,1], index: 0, kind: input, shape index: {}]
  %s1 = inlined_call_operand.vmem [shape: f32[2,8,32], index: 1, kind: input, shape index: {}]
  %s2 = inlined_call_operand.vmem [shape: f32[2,8,1], index: 2, kind: input, shape index: {}]
  %s3 = inlined_call_operand.hbm [shape: f32[2,32], index: 3, kind: output, shape index: {}]
  %s4 = sld [smem:[#allocation0]]
  $region30: #{tpu_custom_call.1} parent=0
    _
  %s6 = ssub.s32 1, %s4
  %s7 = scalar_select 0, %s6, %s4
  %8 = sst [smem:[#allocation3]] %s0
  $region1: #{tpu_custom_call.1} parent=0
    #allocation4 [shape = 'u8[1024]{0}', space=vmem, size = 0x400, scoped, tag = 'output window, operand 0, single buffered']
    #allocation5 [shape = 's32[1]{0}', space=sflag, size = 0x4, scoped, tag = 'scoped memory for tpu_custom_call.1']
    %9 = vsyncpa [#allocation5], 0
    // Predicated region
    $region2: #{tpu_custom_call.1} parent=1 // pred_check
      _
    $region3: #{tpu_custom_call.1} parent=1 // pred_check_branch
      %11 = sbr.rel (0) target = $region5
    $region4: #{tpu_custom_call.1} parent=1 // pred_region
      _
    $region5: #{tpu_custom_call.1} parent=1 // pred_fallthru
      _
    // Predicated region
    $region6: #{tpu_custom_call.1} parent=1 // pred_check
      _
    $region7: #{tpu_custom_call.1} parent=1 // pred_check_branch
      %13 = sbr.rel (0) target = $region9
    $region8: #{tpu_custom_call.1} parent=1 // pred_region
      _
    $region9: #{tpu_custom_call.1} parent=1 // pred_fallthru
      _
    // Predicated region
    $region10: #{tpu_custom_call.1} parent=1 // pred_check
      _
    $region11: #{tpu_custom_call.1} parent=1 // pred_check_branch
      %15 = sbr.rel (0) target = $region13
    $region12: #{tpu_custom_call.1} parent=1 // pred_region
      _
    $region13: #{tpu_custom_call.1} parent=1 // pred_fallthru
      _
    %p16 = scmp.eq.s32.totalorder 0, 0
    // Predicated region
    $region14: #{tpu_custom_call.1} parent=1 // pred_check
      %p17 = pneg %p16
    $region15: #{tpu_custom_call.1} parent=1 // pred_check_branch
      %19 = sbr.rel (%p17) target = $region17
    $region16: #{tpu_custom_call.1} parent=1 // pred_region
      %vm20 = vcmask 254976
      %21 = vst.msk [vmem:[#allocation2] sm:$0x3] %vm20, 0.0
    $region17: #{tpu_custom_call.1} parent=1 // pred_fallthru
      _
    %v22 = vld [vmem:[%s1] sm:$0xff]
    %v23 = vld [vmem:[%s1 + $0x8] sm:$0xff]
    %v24 = vld [vmem:[%s2] sm:$0xff]
    %v25 = vld [vmem:[%s2 + $0x8] sm:$0xff]
    %v26 = vld [vmem:[#allocation2] sm:$0x3]
    %28 = vset.pattern.permute.xlu0 0
    %29 = vperm.xlu0 %28, %v24
    %v30 = vpop.permute.xlu0 %29
    %33 = vset.pattern.permute.xlu0 0
    %34 = vperm.xlu0 %33, %v25
    %v35 = vpop.permute.xlu0 %34
    %v37 = vmul.f32 %v22, %v30
    %v38 = vmul.f32 %v23, %v35
    %vm39 = vcmask 261120
    %v40 = vsel %vm39, %v37, 0.0
    %v41 = vrot.slane %v40, 4
    %v42 = vadd.f32 %v40, %v41
    %v43 = vrot.slane %v42, 2
    %v44 = vadd.f32 %v42, %v43
    %v45 = vrot.slane %v44, 1
    %v46 = vadd.f32 %v44, %v45
    %v47 = vsel %vm39, %v38, 0.0
    %v48 = vrot.slane %v47, 4
    %v49 = vadd.f32 %v47, %v48
    %v50 = vrot.slane %v49, 2
    %v51 = vadd.f32 %v49, %v50
    %v52 = vrot.slane %v51, 1
    %v53 = vadd.f32 %v51, %v52
    %vm56 = vcmask 1041409
    %v57 = vsel %vm56, %v53, %v46
    %v59 = vadd.f32 %v26, %v57
    %vm60 = vcmask 254976
    %61 = vst.msk [vmem:[#allocation2] sm:$0x3] %vm60, %v59
    // Predicated region
    $region18: #{tpu_custom_call.1} parent=1 // pred_check
      %p62 = pneg %p16
    $region19: #{tpu_custom_call.1} parent=1 // pred_check_branch
      %64 = sbr.rel (%p62) target = $region21
    $region20: #{tpu_custom_call.1} parent=1 // pred_region
      %v65 = vld [vmem:[#allocation2] sm:$0x3]
      %s66 = sld [smem:[#allocation3]]
      %v67 = vstv %s66
      %v68 = vmul.f32 %v65, %v67
      %69 = vst.msk [vmem:[#allocation4] sm:$0x3] %vm60, %v68
    $region21: #{tpu_custom_call.1} parent=1 // pred_fallthru
      _
    // Predicated region
    $region22: #{tpu_custom_call.1} parent=1 // pred_check
      _
    $region23: #{tpu_custom_call.1} parent=1 // pred_check_branch
      %71 = sbr.rel (0) target = $region25
    $region24: #{tpu_custom_call.1} parent=1 // pred_region
      %s73 = ssub.s32 32, 32
      %74 = vsyncadd [#allocation5], %s73
      %s76 = sshll.u32 [#allocation4], 4
      %s77 = int_to_ptr.vmem [resolvable:$true] %s76
      %79 = dma.vmem_to_hbm [thread:$0]  %s77, 32, %s3, [#allocation5]
    $region25: #{tpu_custom_call.1} parent=1 // pred_fallthru
      _
    // Predicated region
    $region26: #{tpu_custom_call.1} parent=1 // pred_check
      _
    $region27: #{tpu_custom_call.1} parent=1 // pred_check_branch
      %81 = sbr.rel (0) target = $region29
    $region28: #{tpu_custom_call.1} parent=1 // pred_region
      %82 = dma.done [#allocation5], 32
    $region29: #{tpu_custom_call.1} parent=1 // pred_fallthru
      _
    %83 = vsyncpa [#allocation5], 1

</llo_original>
